<compile_context>
chip_gen: v7x
topology: tpu7x:2x2x1
jax: 0.10.0
libtpu: 0.0.40
codegen_flags: <defaults>
</compile_context>

<pallas_src>
import jax
import jax.numpy as jnp
from jax.experimental import pallas as pl
from jax.experimental.pallas import tpu as pltpu


def _make_unet_down_kernel(Ho, Wo):
    P = Ho * Wo
    shifts = ((0, 0), (0, 1), (1, 0), (1, 1))   # shift index s = 2*ah + aw

    def kernel(x_ref, w_ref, o_ref):
        # x_ref: (1, Ho+1, Wo+1, 4*Cin)  bf16  space-to-depth of the padded input
        # w_ref: (4, 4*Cin, Cout)        bf16  per-shift weight slabs
        # o_ref: (1, Cout, P)            f32   NCHW-flat output for this sample
        kc = x_ref.shape[-1]
        cout = o_ref.shape[1]

        # Conv as 4 shifted (P, K) x (K, Cout) bf16 matmuls, accumulated in f32.
        # In-kernel im2col: the shifted patches are static slices of the VMEM tile.
        acc = jnp.zeros((P, cout), jnp.float32)
        for s, (ah, aw) in enumerate(shifts):
            patch = x_ref[0, ah:ah + Ho, aw:aw + Wo, :].reshape(P, kc)   # (P, K) bf16
            acc = acc + jnp.dot(patch, w_ref[s],
                                preferred_element_type=jnp.float32)

        # InstanceNorm2d over the spatial dim (biased variance, eps=1e-5, no affine).
        mean = jnp.mean(acc, axis=0, keepdims=True)            # (1, Cout)
        yc = acc - mean                                        # hoisted, reused twice
        var = jnp.mean(yc * yc, axis=0, keepdims=True)
        yn = yc * jax.lax.rsqrt(var + 1e-5)

        # LeakyReLU(0.2); store channel-major so the wrapper output is already NCHW.
        out = jnp.where(yn > 0, yn, 0.2 * yn)                  # (P, Cout)
        o_ref[0] = out.T.astype(o_ref.dtype)                   # (Cout, P)

    return kernel


def unet_down(x, weight):
    """x: (N, Cin, H, W) f32, weight: (Cout, Cin, 4, 4) f32.

    Returns (N, Cout, H//2, W//2) f32, matching
    LeakyReLU(InstanceNorm2d(Conv2d(k=4, s=2, p=1, bias=False)(x)), 0.2).
    """
    N, Cin, H, W = x.shape
    Cout = weight.shape[0]
    assert H % 2 == 0 and W % 2 == 0, "pix2pix k=4,s=2,p=1 shapes require even H, W"
    Ho, Wo = H // 2, W // 2
    Hp, Wp = Ho + 1, Wo + 1
    Kc = 4 * Cin
    P = Ho * Wo

    # ---- glue: 1x-sized space-to-depth relayout (no 4x im2col), cast to bf16 ----
    # xs[n, p, q, ci*4 + bh*2 + bw] = x_pad[n, ci, 2p + bh, 2q + bw]
    x_pad = jnp.pad(x.astype(jnp.bfloat16), ((0, 0), (0, 0), (1, 1), (1, 1)))
    xs = (x_pad.reshape(N, Cin, Hp, 2, Wp, 2)
               .transpose(0, 2, 4, 1, 3, 5)
               .reshape(N, Hp, Wp, Kc))

    # w_shift[2*ah + aw, ci*4 + 2*bh + bw, co] = weight[co, ci, 2*ah + bh, 2*aw + bw]
    w_shift = (weight.astype(jnp.bfloat16)
               .reshape(Cout, Cin, 2, 2, 2, 2)       # (co, ci, ah, bh, aw, bw)
               .transpose(2, 4, 1, 3, 5, 0)          # (ah, aw, ci, bh, bw, co)
               .reshape(4, Kc, Cout))

    # VMEM budget: double-buffered blocks + in-kernel f32 intermediates, with headroom.
    blk_bytes = 2 * (Hp * Wp * Kc * 2 + 4 * Kc * Cout * 2 + Cout * P * 4)
    scratch_bytes = P * Kc * 2 + 3 * P * Cout * 4
    vmem_limit = int(min(128 * 1024 * 1024,
                         max(32 * 1024 * 1024, 2 * (blk_bytes + scratch_bytes))))

    out_flat = pl.pallas_call(
        _make_unet_down_kernel(Ho, Wo),
        out_shape=jax.ShapeDtypeStruct((N, Cout, P), jnp.float32),
        grid_spec=pltpu.PrefetchScalarGridSpec(
            num_scalar_prefetch=0,
            grid=(N,),
            in_specs=[
                pl.BlockSpec((1, Hp, Wp, Kc), lambda n: (n, 0, 0, 0)),
                pl.BlockSpec((4, Kc, Cout), lambda n: (0, 0, 0)),
            ],
            out_specs=pl.BlockSpec((1, Cout, P), lambda n: (n, 0, 0)),
        ),
        compiler_params=pltpu.CompilerParams(
            dimension_semantics=("parallel",),
            vmem_limit_bytes=vmem_limit),
    )(xs, w_shift)

    # (N, Cout, P) -> (N, Cout, Ho, Wo): reshape only, already NCHW.
    return out_flat.reshape(N, Cout, Ho, Wo)


def _reference(x, weight):
    """Pure-JAX f32 reference of the same forward pass (sanity check)."""
    y = jax.lax.conv_general_dilated(
        x, weight, window_strides=(2, 2), padding=((1, 1), (1, 1)),
        dimension_numbers=("NCHW", "OIHW", "NCHW"))
    mean = jnp.mean(y, axis=(2, 3), keepdims=True)
    var = jnp.mean((y - mean) ** 2, axis=(2, 3), keepdims=True)
    yn = (y - mean) * jax.lax.rsqrt(var + 1e-5)
    return jnp.where(yn > 0, yn, 0.2 * yn)


if __name__ == "__main__":
    key = jax.random.PRNGKey(0)
    kx, kw = jax.random.split(key)

    N, Cin, H, W = 2, 4, 16, 16
    Cout = 8

    x = jax.random.normal(kx, (N, Cin, H, W), dtype=jnp.float32)
    # Deterministic conv weight (Conv2d(in=4, out=8, k=4, bias=False) shape)
    weight = jax.random.normal(kw, (Cout, Cin, 4, 4), dtype=jnp.float32) * 0.1

    out = jax.block_until_ready(unet_down(x, weight))
    ref = jax.block_until_ready(_reference(x, weight))

    assert out.shape == (N, Cout, H // 2, W // 2), out.shape
    # bf16 MXU operands with f32 accumulation -> slightly looser tolerance vs f32 ref.
    assert jnp.allclose(out, ref, atol=5e-2, rtol=5e-2), (
        "mismatch vs reference, max abs diff = %g"
        % float(jnp.max(jnp.abs(out - ref))))
    print("KERNEL_OK")
</pallas_src>

<mosaic_0001>
module attributes {stable_mosaic.version = 11 : i64} {
  func.func @kernel(%arg0: i32, %arg1: memref<1x9x9x16xbf16, #tpu.memory_space<vmem>>, %arg2: memref<4x16x8xbf16, #tpu.memory_space<vmem>>, %arg3: memref<1x8x64xf32, #tpu.memory_space<vmem>>) attributes {dimension_semantics = [#tpu.dimension_semantics<parallel>], iteration_bounds = array<i64: 2>, scalar_prefetch = 0 : i64, scratch_operands = 0 : i64, tpu.core_type = #tpu.core_type<tc>, window_params = [{transform_indices = @transform_0, window_bounds = array<i64: 1, 9, 9, 16>}, {pipeline_mode = #tpu.pipeline_mode<synchronous>, transform_indices = @transform_1, window_bounds = array<i64: 4, 16, 8>}, {transform_indices = @transform_2, window_bounds = array<i64: 1, 8, 64>}]} {
    %cst = arith.constant 0.000000e+00 : f32
    %0 = vector.broadcast %cst : f32 to vector<64x8xf32>
    %c0 = arith.constant 0 : index
    %c0_0 = arith.constant 0 : index
    %c0_1 = arith.constant 0 : index
    %c0_2 = arith.constant 0 : index
    %1 = vector.load %arg1[%c0, %c0_0, %c0_1, %c0_2] : memref<1x9x9x16xbf16, #tpu.memory_space<vmem>>, vector<1x8x8x16xbf16>
    %2 = vector.shape_cast %1 : vector<1x8x8x16xbf16> to vector<8x8x16xbf16>
    %3 = vector.shape_cast %2 : vector<8x8x16xbf16> to vector<64x16xbf16>
    %c0_3 = arith.constant 0 : index
    %c0_4 = arith.constant 0 : index
    %c0_5 = arith.constant 0 : index
    %4 = vector.load %arg2[%c0_3, %c0_4, %c0_5] : memref<4x16x8xbf16, #tpu.memory_space<vmem>>, vector<1x16x8xbf16>
    %5 = vector.shape_cast %4 : vector<1x16x8xbf16> to vector<16x8xbf16>
    %cst_6 = arith.constant dense<0.000000e+00> : vector<64x8xf32>
    %6 = tpu.matmul %3, %5, %cst_6 {dimension_numbers = #tpu.dot_dimension_numbers<[1], [0], [0], [1], [0, 0, 1, 1], [], []>} : vector<64x16xbf16>, vector<16x8xbf16>, vector<64x8xf32> -> vector<64x8xf32>
    %7 = arith.addf %0, %6 : vector<64x8xf32>
    %c0_7 = arith.constant 0 : index
    %c0_8 = arith.constant 0 : index
    %c1 = arith.constant 1 : index
    %c0_9 = arith.constant 0 : index
    %8 = vector.load %arg1[%c0_7, %c0_8, %c1, %c0_9] : memref<1x9x9x16xbf16, #tpu.memory_space<vmem>>, vector<1x8x8x16xbf16>
    %9 = vector.shape_cast %8 : vector<1x8x8x16xbf16> to vector<8x8x16xbf16>
    %10 = vector.shape_cast %9 : vector<8x8x16xbf16> to vector<64x16xbf16>
    %c1_10 = arith.constant 1 : index
    %c0_11 = arith.constant 0 : index
    %c0_12 = arith.constant 0 : index
    %11 = vector.load %arg2[%c1_10, %c0_11, %c0_12] : memref<4x16x8xbf16, #tpu.memory_space<vmem>>, vector<1x16x8xbf16>
    %12 = vector.shape_cast %11 : vector<1x16x8xbf16> to vector<16x8xbf16>
    %cst_13 = arith.constant dense<0.000000e+00> : vector<64x8xf32>
    %13 = tpu.matmul %10, %12, %cst_13 {dimension_numbers = #tpu.dot_dimension_numbers<[1], [0], [0], [1], [0, 0, 1, 1], [], []>} : vector<64x16xbf16>, vector<16x8xbf16>, vector<64x8xf32> -> vector<64x8xf32>
    %14 = arith.addf %7, %13 : vector<64x8xf32>
    %c0_14 = arith.constant 0 : index
    %c1_15 = arith.constant 1 : index
    %c0_16 = arith.constant 0 : index
    %c0_17 = arith.constant 0 : index
    %15 = vector.load %arg1[%c0_14, %c1_15, %c0_16, %c0_17] : memref<1x9x9x16xbf16, #tpu.memory_space<vmem>>, vector<1x8x8x16xbf16>
    %16 = vector.shape_cast %15 : vector<1x8x8x16xbf16> to vector<8x8x16xbf16>
    %17 = vector.shape_cast %16 : vector<8x8x16xbf16> to vector<64x16xbf16>
    %c2 = arith.constant 2 : index
    %c0_18 = arith.constant 0 : index
    %c0_19 = arith.constant 0 : index
    %18 = vector.load %arg2[%c2, %c0_18, %c0_19] : memref<4x16x8xbf16, #tpu.memory_space<vmem>>, vector<1x16x8xbf16>
    %19 = vector.shape_cast %18 : vector<1x16x8xbf16> to vector<16x8xbf16>
    %cst_20 = arith.constant dense<0.000000e+00> : vector<64x8xf32>
    %20 = tpu.matmul %17, %19, %cst_20 {dimension_numbers = #tpu.dot_dimension_numbers<[1], [0], [0], [1], [0, 0, 1, 1], [], []>} : vector<64x16xbf16>, vector<16x8xbf16>, vector<64x8xf32> -> vector<64x8xf32>
    %21 = arith.addf %14, %20 : vector<64x8xf32>
    %c0_21 = arith.constant 0 : index
    %c1_22 = arith.constant 1 : index
    %c1_23 = arith.constant 1 : index
    %c0_24 = arith.constant 0 : index
    %22 = vector.load %arg1[%c0_21, %c1_22, %c1_23, %c0_24] : memref<1x9x9x16xbf16, #tpu.memory_space<vmem>>, vector<1x8x8x16xbf16>
    %23 = vector.shape_cast %22 : vector<1x8x8x16xbf16> to vector<8x8x16xbf16>
    %24 = vector.shape_cast %23 : vector<8x8x16xbf16> to vector<64x16xbf16>
    %c3 = arith.constant 3 : index
    %c0_25 = arith.constant 0 : index
    %c0_26 = arith.constant 0 : index
    %25 = vector.load %arg2[%c3, %c0_25, %c0_26] : memref<4x16x8xbf16, #tpu.memory_space<vmem>>, vector<1x16x8xbf16>
    %26 = vector.shape_cast %25 : vector<1x16x8xbf16> to vector<16x8xbf16>
    %cst_27 = arith.constant dense<0.000000e+00> : vector<64x8xf32>
    %27 = tpu.matmul %24, %26, %cst_27 {dimension_numbers = #tpu.dot_dimension_numbers<[1], [0], [0], [1], [0, 0, 1, 1], [], []>} : vector<64x16xbf16>, vector<16x8xbf16>, vector<64x8xf32> -> vector<64x8xf32>
    %28 = arith.addf %21, %27 : vector<64x8xf32>
    %cst_28 = arith.constant dense<0.000000e+00> : vector<8xf32>
    %29 = vector.multi_reduction <add>, %28, %cst_28 [0] : vector<64x8xf32> to vector<8xf32>
    %30 = vector.shape_cast %29 : vector<8xf32> to vector<1x8xf32>
    %cst_29 = arith.constant 6.400000e+01 : f32
    %31 = vector.broadcast %cst_29 : f32 to vector<1x8xf32>
    %32 = arith.divf %30, %31 : vector<1x8xf32>
    %33 = vector.broadcast %32 : vector<1x8xf32> to vector<64x8xf32>
    %34 = arith.subf %28, %33 : vector<64x8xf32>
    %35 = arith.mulf %34, %34 : vector<64x8xf32>
    %cst_30 = arith.constant dense<0.000000e+00> : vector<8xf32>
    %36 = vector.multi_reduction <add>, %35, %cst_30 [0] : vector<64x8xf32> to vector<8xf32>
    %37 = vector.shape_cast %36 : vector<8xf32> to vector<1x8xf32>
    %cst_31 = arith.constant 6.400000e+01 : f32
    %38 = vector.broadcast %cst_31 : f32 to vector<1x8xf32>
    %39 = arith.divf %37, %38 : vector<1x8xf32>
    %cst_32 = arith.constant 9.99999974E-6 : f32
    %40 = vector.broadcast %cst_32 : f32 to vector<1x8xf32>
    %41 = arith.addf %39, %40 : vector<1x8xf32>
    %42 = math.rsqrt %41 : vector<1x8xf32>
    %43 = vector.broadcast %42 : vector<1x8xf32> to vector<64x8xf32>
    %44 = arith.mulf %34, %43 : vector<64x8xf32>
    %cst_33 = arith.constant 0.000000e+00 : f32
    %45 = vector.broadcast %cst_33 : f32 to vector<64x8xf32>
    %46 = arith.cmpf ogt, %44, %45 : vector<64x8xf32>
    %cst_34 = arith.constant 2.000000e-01 : f32
    %47 = vector.broadcast %cst_34 : f32 to vector<64x8xf32>
    %48 = arith.mulf %47, %44 : vector<64x8xf32>
    %49 = arith.select %46, %44, %48 : vector<64x8xi1>, vector<64x8xf32>
    %50 = tpu.transpose %49, [1, 0] : vector<64x8xf32> -> vector<8x64xf32>
    %c0_35 = arith.constant 0 : index
    %c0_36 = arith.constant 0 : index
    %c0_37 = arith.constant 0 : index
    %51 = vector.load %arg3[%c0_35, %c0_36, %c0_37] : memref<1x8x64xf32, #tpu.memory_space<vmem>>, vector<1x8x64xf32>
    %52 = vector.shape_cast %51 : vector<1x8x64xf32> to vector<8x64xf32>
    %53 = vector.shape_cast %50 : vector<8x64xf32> to vector<1x8x64xf32>
    tpu.vector_store %arg3[%c0_35, %c0_36, %c0_37], %53 {strides = array<i32>} : memref<1x8x64xf32, #tpu.memory_space<vmem>>, vector<1x8x64xf32>,
    return
  }
  func.func @transform_0(%arg0: i32) -> (i32, i32, i32, i32) {
    %c0_i32 = arith.constant 0 : i32
    %c0_i32_0 = arith.constant 0 : i32
    %c0_i32_1 = arith.constant 0 : i32
    %c0_i32_2 = arith.constant 0 : i32
    return %arg0, %c0_i32, %c0_i32_0, %c0_i32_1 : i32, i32, i32, i32
  }
  func.func @transform_1(%arg0: i32) -> (i32, i32, i32) {
    %c0_i32 = arith.constant 0 : i32
    %c0_i32_0 = arith.constant 0 : i32
    %c0_i32_1 = arith.constant 0 : i32
    %c0_i32_2 = arith.constant 0 : i32
    return %c0_i32, %c0_i32_0, %c0_i32_1 : i32, i32, i32
  }
  func.func @transform_2(%arg0: i32) -> (i32, i32, i32) {
    %c0_i32 = arith.constant 0 : i32
    %c0_i32_0 = arith.constant 0 : i32
    %c0_i32_1 = arith.constant 0 : i32
    return %arg0, %c0_i32, %c0_i32_0 : i32, i32, i32
  }
}

</mosaic_0001>

<llo_original>
// kernel: tpu_custom_call.1
$region0: #{tpu_custom_call.1}
  #allocation0 [shape = 'u32[]', space=smem, size = 0x4, offset = 0x4, fixed_abs, tag = 'smem constant byte address 0x4 - core index']
  #allocation1 [shape = 'u32[144,128]{1,0:T(1,128)}', space=vmem, size = 0x12000, scoped, tag = 'internal scratch']
  %s0 = inlined_call_operand.vmem [shape: bf16[2,9,9,16], index: 0, kind: input, shape index: {}]
  %s1 = inlined_call_operand.vmem [shape: bf16[4,16,8], index: 1, kind: input, shape index: {}]
  %s2 = inlined_call_operand.hbm [shape: f32[2,8,64], index: 2, kind: output, shape index: {}]
  %s3 = sld [smem:[#allocation0]]
  $region41: #{tpu_custom_call.1} parent=0
    _
  %s5 = ssub.s32 1, %s3
  %s6 = scalar_select 0, %s5, %s3
  $region1: #{tpu_custom_call.1} parent=0
    #allocation2 [shape = 'u8[8192]{0}', space=vmem, size = 0x2000, scoped, tag = 'output window, operand 0']
    #allocation3 [shape = 's32[2]{0}', space=sflag, size = 0x8, scoped, tag = 'scoped memory for tpu_custom_call.1']
    %7 = vsyncpa [#allocation3], 0
    %s8 = scalar_lea.sflag [#allocation3], 1
    %9 = vsyncpa %s8, 0
    loop: start=0, step=1, limit=4
    $region2: #{tpu_custom_call.1} parent=1 // loop_pre_header
      _
    $region3: #{tpu_custom_call.1} parent=1 // loop_header
      %s11 = sphi 0, %s15
      %p12 = scmp.ge.s32.totalorder %s11, 4
      %s21 = sphi 0, %s23
      %s24 = sphi 0, %s21
      %s25 = sphi 0, %s24
      %s41 = sphi 0, %s25
      %s45 = sphi 0, %s45
      %s47 = sphi 0, %s45
      %s48 = sphi 0, %s47
      %s62 = sphi 0, %s48
      %s68 = sphi 0, %s70
      %s71 = sphi 0, %s68
      %s72 = sphi 0, %s71
      %s88 = sphi 0, %s72
    $region4: #{tpu_custom_call.1} parent=1 // loop_header_branch
      %14 = sbr.rel (%p12) target = $region8
    $region5: #{tpu_custom_call.1} parent=1 // loop_body
      %s16 = ssub.s32 %s11, 1
      %s17 = ssub.s32 %s11, 2
      %s18 = sadd.s32 %s11, 1
      %s19 = ssub.s32 %s11, %s18
      %p20 = scmp.eq.s32.totalorder %s19, 0
      %s22 = sadd.s32 %s21, 1
      %s23 = scalar_select %p20, %s21, %s22
      %p26 = pneg %p20
      %p27 = scmp.eq.s32.totalorder %s11, 1
      %p28 = por %p26, %p27
      %p29 = scmp.ne.s32.totalorder %s21, %s24
      %p30 = scmp.eq.s32.totalorder %s11, 0
      %p31 = por %p29, %p30
      %p32 = scmp.ne.s32.totalorder %s21, %s24
      %p33 = scmp.eq.s32.totalorder %s16, 1
      %p34 = por %p32, %p33
      %p35 = scmp.ne.s32.totalorder %s24, %s25
      %p36 = scmp.eq.s32.totalorder %s16, 0
      %p37 = por %p35, %p36
      %p38 = scmp.ne.s32.totalorder %s24, %s25
      %p39 = scmp.eq.s32.totalorder %s17, 1
      %p40 = por %p38, %p39
      %p42 = scmp.ne.s32.totalorder %s25, %s41
      %p43 = scmp.eq.s32.totalorder %s17, 0
      %p44 = por %p42, %p43
      %s46 = sadd.s32 %s45, 1
      %p49 = scmp.eq.s32.totalorder %s11, 1
      %p50 = scmp.ne.s32.totalorder %s45, %s47
      %p51 = scmp.eq.s32.totalorder %s11, 0
      %p52 = por %p50, %p51
      %p53 = scmp.ne.s32.totalorder %s45, %s47
      %p54 = scmp.eq.s32.totalorder %s16, 1
      %p55 = por %p53, %p54
      %p56 = scmp.ne.s32.totalorder %s47, %s48
      %p57 = scmp.eq.s32.totalorder %s16, 0
      %p58 = por %p56, %p57
      %p59 = scmp.ne.s32.totalorder %s47, %s48
      %p60 = scmp.eq.s32.totalorder %s17, 1
      %p61 = por %p59, %p60
      %p63 = scmp.ne.s32.totalorder %s48, %s62
      %p64 = scmp.eq.s32.totalorder %s17, 0
      %p65 = por %p63, %p64
      %s66 = ssub.s32 %s11, %s18
      %p67 = scmp.eq.s32.totalorder %s66, 0
      %s69 = sadd.s32 %s68, 1
      %s70 = scalar_select %p67, %s68, %s69
      %p73 = pneg %p67
      %p74 = scmp.eq.s32.totalorder %s11, 1
      %p75 = por %p73, %p74
      %p76 = scmp.ne.s32.totalorder %s68, %s71
      %p77 = scmp.eq.s32.totalorder %s11, 0
      %p78 = por %p76, %p77
      %p79 = scmp.ne.s32.totalorder %s68, %s71
      %p80 = scmp.eq.s32.totalorder %s16, 1
      %p81 = por %p79, %p80
      %p82 = scmp.ne.s32.totalorder %s71, %s72
      %p83 = scmp.eq.s32.totalorder %s16, 0
      %p84 = por %p82, %p83
      %p85 = scmp.ne.s32.totalorder %s71, %s72
      %p86 = scmp.eq.s32.totalorder %s17, 1
      %p87 = por %p85, %p86
      %p89 = scmp.ne.s32.totalorder %s72, %s88
      %p90 = scmp.eq.s32.totalorder %s17, 0
      %p91 = por %p89, %p90
      %p92 = scmp.le.s32.totalorder 1, %s11
      %p93 = scmp.lt.s32.totalorder %s11, 3
      %p94 = pnand %p92, %p93
      %p95 = pneg %p94
      // Predicated region
      $region9: #{tpu_custom_call.1} parent=5 // pred_check
        _
      $region10: #{tpu_custom_call.1} parent=5 // pred_check_branch
        %97 = sbr.rel (%p94) target = $region12
      $region11: #{tpu_custom_call.1} parent=5 // pred_region
        %s98 = ssub.s32 %s11, 1
        // Predicated region
        $region13: #{tpu_custom_call.1} parent=11 // pred_check
          %p99 = pneg %p58
        $region14: #{tpu_custom_call.1} parent=11 // pred_check_branch
          %101 = sbr.rel (%p99) target = $region16
        $region15: #{tpu_custom_call.1} parent=11 // pred_region
          _
        $region16: #{tpu_custom_call.1} parent=11 // pred_fallthru
          _
      $region12: #{tpu_custom_call.1} parent=5 // pred_fallthru
        _
      %p102 = scmp.lt.s32.totalorder %s11, 2
      // Predicated region
      $region17: #{tpu_custom_call.1} parent=5 // pred_check
        %p103 = pneg %p102
      $region18: #{tpu_custom_call.1} parent=5 // pred_check_branch
        %105 = sbr.rel (%p103) target = $region20
      $region19: #{tpu_custom_call.1} parent=5 // pred_region
        // Predicated region
        $region21: #{tpu_custom_call.1} parent=19 // pred_check
          %p106 = pneg %p31
        $region22: #{tpu_custom_call.1} parent=19 // pred_check_branch
          %108 = sbr.rel (%p106) target = $region24
        $region23: #{tpu_custom_call.1} parent=19 // pred_region
          %p109 = scmp.lt.s32.totalorder %s11, 1
          %s110 = scalar_select %p109, %s11, 1
          %s111 = smul.addr %s110, 18
          %s112 = smul.addr %s111, 4
          %s113 = scalar_lea.vmem %s0, %s112
        $region24: #{tpu_custom_call.1} parent=19 // pred_fallthru
          _
      $region20: #{tpu_custom_call.1} parent=5 // pred_fallthru
        _
      %p114 = scmp.le.s32.totalorder 1, %s11
      %p115 = scmp.lt.s32.totalorder %s11, 3
      %p116 = pnand %p114, %p115
      %p117 = pneg %p116
      // Predicated region
      $region25: #{tpu_custom_call.1} parent=5 // pred_check
        _
      $region26: #{tpu_custom_call.1} parent=5 // pred_check_branch
        %119 = sbr.rel (%p116) target = $region28
      $region27: #{tpu_custom_call.1} parent=5 // pred_region
        %s120 = ssub.s32 %s11, 1
        %p121 = scmp.lt.s32.totalorder %s16, 1
        %s122 = scalar_select %p121, %s16, 1
        %s123 = smul.addr %s122, 18
        %s124 = smul.addr %s123, 4
        %s125 = scalar_lea.vmem %s0, %s124
        %p126 = pneg %p37
        %p127 = pneg %p34
        %p128 = pneg %p58
        %p129 = pneg %p55
        %p130 = pneg %p84
        %p131 = pneg %p81
        %s132 = sand.u32 %s71, 1
        %s133 = scalar_lea.sflag [#allocation3], %s132
        %s134 = sand.u32 %s71, 1
        %s135 = smul.addr %s134, 8
        %s136 = scalar_lea.vmem [#allocation2], %s135
        %p137 = scmp.lt.s32.totalorder %s16, 1
        %s138 = scalar_select %p137, %s16, 1
        %s139 = smul.addr %s138, 18
        %s140 = smul.addr %s139, 4
        %s141 = scalar_lea.vmem %s0, %s140
        %v143 = vld [vmem:[%s141] sm:$0xf]
        %v144 = vld [vmem:[%s141 + $0x8] sm:$0xf]
        %v145 = vld [vmem:[%s141 + $0x10] sm:$0xf]
        %v146 = vld [vmem:[%s141 + $0x18] sm:$0xf]
        %v147 = vld [vmem:[%s141 + $0x20] sm:$0xf]
        %v148 = vld [vmem:[%s141 + $0x28] sm:$0xf]
        %v149 = vld [vmem:[%s141 + $0x30] sm:$0xf]
        %v150 = vld [vmem:[%s141 + $0x38] sm:$0xf]
        %v151 = vld [vmem:[%s1] sm:$0xf]
        %v152 = vld [vmem:[%s1 + $0x4] sm:$0xf]
        %v153 = vld [vmem:[%s141 + $0x4] sm:$0x1]
        %v154 = vld [vmem:[%s141 + $0xc] sm:$0x1]
        %v155 = vld [vmem:[%s141 + $0x14] sm:$0x1]
        %v156 = vld [vmem:[%s141 + $0x1c] sm:$0x1]
        %v157 = vld [vmem:[%s141 + $0x24] sm:$0x1]
        %v158 = vld [vmem:[%s141 + $0x2c] sm:$0x1]
        %v159 = vld [vmem:[%s141 + $0x34] sm:$0x1]
        %v160 = vld [vmem:[%s141 + $0x3c] sm:$0x1]
        %vm161 = vsmask.f32 3328
        %vm162 = vsmask.f32 7440
        %vm163 = vmor %vm161, %vm162
        %v165 = vshrl.u32 %v143, 16
        %v167 = vrot.slane %v165, 4
        %v168 = vshll.u32 %v143, 16
        %v170 = vrot.slane %v168, 5
        %v171 = vor.u32 %v167, %v170
        %v172 = vrot.slane %v171, 4
        %v174 = vshll.u32 %v153, 16
        %v176 = vrot.slane %v174, 5
        %v177 = vsel %vm163, %v172, %v176
        %v179 = vshrl.u32 %v144, 16
        %v181 = vrot.slane %v179, 4
        %v182 = vshll.u32 %v144, 16
        %v184 = vrot.slane %v182, 5
        %v185 = vor.u32 %v181, %v184
        %v186 = vrot.slane %v185, 4
        %v188 = vshll.u32 %v154, 16
        %v190 = vrot.slane %v188, 5
        %v191 = vsel %vm163, %v186, %v190
        %v193 = vshrl.u32 %v145, 16
        %v195 = vrot.slane %v193, 4
        %v196 = vshll.u32 %v145, 16
        %v198 = vrot.slane %v196, 5
        %v199 = vor.u32 %v195, %v198
        %v200 = vrot.slane %v199, 4
        %v202 = vshll.u32 %v155, 16
        %v204 = vrot.slane %v202, 5
        %v205 = vsel %vm163, %v200, %v204
        %v207 = vshrl.u32 %v146, 16
        %v209 = vrot.slane %v207, 4
        %v210 = vshll.u32 %v146, 16
        %v212 = vrot.slane %v210, 5
        %v213 = vor.u32 %v209, %v212
        %v214 = vrot.slane %v213, 4
        %v216 = vshll.u32 %v156, 16
        %v218 = vrot.slane %v216, 5
        %v219 = vsel %vm163, %v214, %v218
        %v221 = vshrl.u32 %v147, 16
        %v223 = vrot.slane %v221, 4
        %v224 = vshll.u32 %v147, 16
        %v226 = vrot.slane %v224, 5
        %v227 = vor.u32 %v223, %v226
        %v228 = vrot.slane %v227, 4
        %v230 = vshll.u32 %v157, 16
        %v232 = vrot.slane %v230, 5
        %v233 = vsel %vm163, %v228, %v232
        %v235 = vshrl.u32 %v148, 16
        %v237 = vrot.slane %v235, 4
        %v238 = vshll.u32 %v148, 16
        %v240 = vrot.slane %v238, 5
        %v241 = vor.u32 %v237, %v240
        %v242 = vrot.slane %v241, 4
        %v244 = vshll.u32 %v158, 16
        %v246 = vrot.slane %v244, 5
        %v247 = vsel %vm163, %v242, %v246
        %v249 = vshrl.u32 %v149, 16
        %v251 = vrot.slane %v249, 4
        %v252 = vshll.u32 %v149, 16
        %v254 = vrot.slane %v252, 5
        %v255 = vor.u32 %v251, %v254
        %v256 = vrot.slane %v255, 4
        %v258 = vshll.u32 %v159, 16
        %v260 = vrot.slane %v258, 5
        %v261 = vsel %vm163, %v256, %v260
        %v263 = vshrl.u32 %v150, 16
        %v265 = vrot.slane %v263, 4
        %v266 = vshll.u32 %v150, 16
        %v268 = vrot.slane %v266, 5
        %v269 = vor.u32 %v265, %v268
        %v270 = vrot.slane %v269, 4
        %v272 = vshll.u32 %v160, 16
        %v274 = vrot.slane %v272, 5
        %v275 = vsel %vm163, %v270, %v274
        %s276 = scalar_lea.vmem %s1, 8
        %v277 = vld [vmem:[%s276] sm:$0xf]
        %v278 = vld [vmem:[%s276 + $0x4] sm:$0xf]
        %v279 = vunpack.c.l.b16 %v177
        %v280 = vunpack.c.l.b16 %v191
        %v281 = vunpack.c.l.b16 %v205
        %v282 = vunpack.c.l.b16 %v219
        %v283 = vunpack.c.l.b16 %v233
        %v284 = vunpack.c.l.b16 %v247
        %v285 = vunpack.c.l.b16 %v261
        %v286 = vunpack.c.l.b16 %v275
        %v287 = vpack.c.b16 %v280, %v279
        %v288 = vpack.c.b16 %v282, %v281
        %v289 = vpack.c.b16 %v284, %v283
        %v290 = vpack.c.b16 %v286, %v285
        %v293 = vunpack.c.l.b16 %v277
        %v294 = vunpack.c.l.b16 %v278
        %v295 = vpack.c.b16 %v294, %v293
        %vm297 = vcmask 130048
        %v299 = vsel %vm297, %v287, 0
        %v302 = vsel %vm297, %v288, 0
        %v305 = vsel %vm297, %v289, 0
        %v308 = vsel %vm297, %v290, 0
        %310 = vmatprep.subr.bf16.mxu0 0
        %311 = vmatpush1.bf16.msra.mxu0 %v295
        %312 = vmatprep.subr.bf16.mxu0 0
        %313 = vmatpush1.bf16.msra.mxu0 0
        %314 = vmatprep.subr.bf16.mxu0 0
        %315 = vmatpush1.bf16.msra.mxu0 0
        %316 = vmatprep.subr.bf16.mxu0 0
        %317 = vmatpush1.bf16.msra.mxu0 0
        %318 = vmatprep.subr.bf16.mxu0 0
        %319 = vmatpush1.bf16.msra.mxu0 0
        %320 = vmatprep.subr.bf16.mxu0 0
        %321 = vmatpush1.bf16.msra.mxu0 0
        %322 = vmatprep.subr.bf16.mxu0 0
        %323 = vmatpush1.bf16.msra.mxu0 0
        %324 = vmatprep.subr.bf16.mxu0 0
        %325 = vmatpush1.bf16.msra.mxu0 0
        %326 = vmatprep.subr.bf16.mxu0 0
        %327 = vmatpush1.bf16.msra.mxu0 0
        %328 = vmatprep.subr.bf16.mxu0 0
        %329 = vmatpush1.bf16.msra.mxu0 0
        %330 = vmatprep.subr.bf16.mxu0 0
        %331 = vmatpush1.bf16.msra.mxu0 0
        %332 = vmatprep.subr.bf16.mxu0 0
        %333 = vmatpush1.bf16.msra.mxu0 0
        %334 = vmatprep.subr.bf16.mxu0 0
        %335 = vmatpush1.bf16.msra.mxu0 0
        %336 = vmatprep.subr.bf16.mxu0 0
        %337 = vmatpush1.bf16.msra.mxu0 0
        %338 = vmatprep.subr.bf16.mxu0 0
        %339 = vmatpush1.bf16.msra.mxu0 0
        %340 = vmatprep.subr.bf16.mxu0 0
        %341 = vmatpush1.bf16.msra.mxu0 0
        %342 = vmatprep.mubr.bf16.mxu0 0
        %343 = vmatmul.mubr.bf16.gmra.mrb[0].mxu0 %v299
        %v344 = vpop.f32.mrb[0].mxu0
        %v345 = vadd.f32 0.0, %v344
        %v346 = vpop.f32.mrb[0].mxu0
        %v347 = vpop.f32.mrb[0].mxu0
        %v348 = vadd.f32 0.0, %v347
        %v349 = vpop.f32.mrb[0].mxu0
        %350 = vmatprep.mubr.bf16.mxu0 0
        %351 = vmatmul.mubr.bf16.gmra.mrb[0].mxu0 %v302
        %v352 = vpop.f32.mrb[0].mxu0
        %v353 = vadd.f32 0.0, %v352
        %v354 = vpop.f32.mrb[0].mxu0
        %v355 = vpop.f32.mrb[0].mxu0
        %v356 = vadd.f32 0.0, %v355
        %v357 = vpop.f32.mrb[0].mxu0
        %358 = vmatprep.mubr.bf16.mxu0 0
        %359 = vmatmul.mubr.bf16.gmra.mrb[0].mxu0 %v305
        %v360 = vpop.f32.mrb[0].mxu0
        %v361 = vadd.f32 0.0, %v360
        %v362 = vpop.f32.mrb[0].mxu0
        %v363 = vpop.f32.mrb[0].mxu0
        %v364 = vadd.f32 0.0, %v363
        %v365 = vpop.f32.mrb[0].mxu0
        %366 = vmatprep.mubr.bf16.mxu0 0
        %367 = vmatmul.mubr.bf16.gmra.mrb[0].mxu0 %v308
        %v368 = vpop.f32.mrb[0].mxu0
        %v369 = vadd.f32 0.0, %v368
        %v370 = vpop.f32.mrb[0].mxu0
        %v371 = vpop.f32.mrb[0].mxu0
        %v372 = vadd.f32 0.0, %v371
        %v373 = vpop.f32.mrb[0].mxu0
        %374 = vdwg.mxu0
        %v383 = vunpack.c.l.b16 %v143
        %v384 = vunpack.c.l.b16 %v144
        %v385 = vunpack.c.l.b16 %v145
        %v386 = vunpack.c.l.b16 %v146
        %v387 = vunpack.c.l.b16 %v147
        %v388 = vunpack.c.l.b16 %v148
        %v389 = vunpack.c.l.b16 %v149
        %v390 = vunpack.c.l.b16 %v150
        %v391 = vpack.c.b16 %v384, %v383
        %v392 = vpack.c.b16 %v386, %v385
        %v393 = vpack.c.b16 %v388, %v387
        %v394 = vpack.c.b16 %v390, %v389
        %v397 = vunpack.c.l.b16 %v151
        %v398 = vunpack.c.l.b16 %v152
        %v399 = vpack.c.b16 %v398, %v397
        %v402 = vsel %vm297, %v391, 0
        %v405 = vsel %vm297, %v392, 0
        %v408 = vsel %vm297, %v393, 0
        %v411 = vsel %vm297, %v394, 0
        %413 = vmatprep.subr.bf16.mxu0 0
        %414 = vmatpush1.bf16.msra.mxu0 %v399
        %415 = vmatprep.subr.bf16.mxu0 0
        %416 = vmatpush1.bf16.msra.mxu0 0
        %417 = vmatprep.subr.bf16.mxu0 0
        %418 = vmatpush1.bf16.msra.mxu0 0
        %419 = vmatprep.subr.bf16.mxu0 0
        %420 = vmatpush1.bf16.msra.mxu0 0
        %421 = vmatprep.subr.bf16.mxu0 0
        %422 = vmatpush1.bf16.msra.mxu0 0
        %423 = vmatprep.subr.bf16.mxu0 0
        %424 = vmatpush1.bf16.msra.mxu0 0
        %425 = vmatprep.subr.bf16.mxu0 0
        %426 = vmatpush1.bf16.msra.mxu0 0
        %427 = vmatprep.subr.bf16.mxu0 0
        %428 = vmatpush1.bf16.msra.mxu0 0
        %429 = vmatprep.subr.bf16.mxu0 0
        %430 = vmatpush1.bf16.msra.mxu0 0
        %431 = vmatprep.subr.bf16.mxu0 0
        %432 = vmatpush1.bf16.msra.mxu0 0
        %433 = vmatprep.subr.bf16.mxu0 0
        %434 = vmatpush1.bf16.msra.mxu0 0
        %435 = vmatprep.subr.bf16.mxu0 0
        %436 = vmatpush1.bf16.msra.mxu0 0
        %437 = vmatprep.subr.bf16.mxu0 0
        %438 = vmatpush1.bf16.msra.mxu0 0
        %439 = vmatprep.subr.bf16.mxu0 0
        %440 = vmatpush1.bf16.msra.mxu0 0
        %441 = vmatprep.subr.bf16.mxu0 0
        %442 = vmatpush1.bf16.msra.mxu0 0
        %443 = vmatprep.subr.bf16.mxu0 0
        %444 = vmatpush1.bf16.msra.mxu0 0
        %445 = vmatprep.mubr.bf16.mxu0 0
        %446 = vmatmul.mubr.bf16.gmra.mrb[0].mxu0 %v402
        %v447 = vpop.f32.mrb[0].mxu0
        %v448 = vadd.f32 %v345, %v447
        %v449 = vpop.f32.mrb[0].mxu0
        %v450 = vpop.f32.mrb[0].mxu0
        %v451 = vadd.f32 %v348, %v450
        %v452 = vpop.f32.mrb[0].mxu0
        %453 = vmatprep.mubr.bf16.mxu0 0
        %454 = vmatmul.mubr.bf16.gmra.mrb[0].mxu0 %v405
        %v455 = vpop.f32.mrb[0].mxu0
        %v456 = vadd.f32 %v353, %v455
        %v457 = vpop.f32.mrb[0].mxu0
        %v458 = vpop.f32.mrb[0].mxu0
        %v459 = vadd.f32 %v356, %v458
        %v460 = vpop.f32.mrb[0].mxu0
        %461 = vmatprep.mubr.bf16.mxu0 0
        %462 = vmatmul.mubr.bf16.gmra.mrb[0].mxu0 %v408
        %v463 = vpop.f32.mrb[0].mxu0
        %v464 = vadd.f32 %v361, %v463
        %v465 = vpop.f32.mrb[0].mxu0
        %v466 = vpop.f32.mrb[0].mxu0
        %v467 = vadd.f32 %v364, %v466
        %v468 = vpop.f32.mrb[0].mxu0
        %469 = vmatprep.mubr.bf16.mxu0 0
        %470 = vmatmul.mubr.bf16.gmra.mrb[0].mxu0 %v411
        %v471 = vpop.f32.mrb[0].mxu0
        %v472 = vadd.f32 %v369, %v471
        %v473 = vpop.f32.mrb[0].mxu0
        %v474 = vpop.f32.mrb[0].mxu0
        %v475 = vadd.f32 %v372, %v474
        %v476 = vpop.f32.mrb[0].mxu0
        %477 = vdwg.mxu0
        %s478 = scalar_lea.vmem %s141, 8
        %v479 = vld [vmem:[%s478] sm:$0xf]
        %v480 = vld [vmem:[%s478 + $0x8] sm:$0xf]
        %v481 = vld [vmem:[%s478 + $0x10] sm:$0xf]
        %v482 = vld [vmem:[%s478 + $0x18] sm:$0xf]
        %v483 = vld [vmem:[%s478 + $0x20] sm:$0xf]
        %v484 = vld [vmem:[%s478 + $0x28] sm:$0xf]
        %v485 = vld [vmem:[%s478 + $0x30] sm:$0xf]
        %v486 = vld [vmem:[%s478 + $0x38] sm:$0xf]
        %s487 = scalar_lea.vmem %s1, 16
        %v488 = vld [vmem:[%s487] sm:$0xf]
        %v489 = vld [vmem:[%s487 + $0x4] sm:$0xf]
        %v498 = vunpack.c.l.b16 %v479
        %v499 = vunpack.c.l.b16 %v480
        %v500 = vunpack.c.l.b16 %v481
        %v501 = vunpack.c.l.b16 %v482
        %v502 = vunpack.c.l.b16 %v483
        %v503 = vunpack.c.l.b16 %v484
        %v504 = vunpack.c.l.b16 %v485
        %v505 = vunpack.c.l.b16 %v486
        %v506 = vpack.c.b16 %v499, %v498
        %v507 = vpack.c.b16 %v501, %v500
        %v508 = vpack.c.b16 %v503, %v502
        %v509 = vpack.c.b16 %v505, %v504
        %v512 = vunpack.c.l.b16 %v488
        %v513 = vunpack.c.l.b16 %v489
        %v514 = vpack.c.b16 %v513, %v512
        %v517 = vsel %vm297, %v506, 0
        %v520 = vsel %vm297, %v507, 0
        %v523 = vsel %vm297, %v508, 0
        %v526 = vsel %vm297, %v509, 0
        %528 = vmatprep.subr.bf16.mxu0 0
        %529 = vmatpush1.bf16.msra.mxu0 %v514
        %530 = vmatprep.subr.bf16.mxu0 0
        %531 = vmatpush1.bf16.msra.mxu0 0
        %532 = vmatprep.subr.bf16.mxu0 0
        %533 = vmatpush1.bf16.msra.mxu0 0
        %534 = vmatprep.subr.bf16.mxu0 0
        %535 = vmatpush1.bf16.msra.mxu0 0
        %536 = vmatprep.subr.bf16.mxu0 0
        %537 = vmatpush1.bf16.msra.mxu0 0
        %538 = vmatprep.subr.bf16.mxu0 0
        %539 = vmatpush1.bf16.msra.mxu0 0
        %540 = vmatprep.subr.bf16.mxu0 0
        %541 = vmatpush1.bf16.msra.mxu0 0
        %542 = vmatprep.subr.bf16.mxu0 0
        %543 = vmatpush1.bf16.msra.mxu0 0
        %544 = vmatprep.subr.bf16.mxu0 0
        %545 = vmatpush1.bf16.msra.mxu0 0
        %546 = vmatprep.subr.bf16.mxu0 0
        %547 = vmatpush1.bf16.msra.mxu0 0
        %548 = vmatprep.subr.bf16.mxu0 0
        %549 = vmatpush1.bf16.msra.mxu0 0
        %550 = vmatprep.subr.bf16.mxu0 0
        %551 = vmatpush1.bf16.msra.mxu0 0
        %552 = vmatprep.subr.bf16.mxu0 0
        %553 = vmatpush1.bf16.msra.mxu0 0
        %554 = vmatprep.subr.bf16.mxu0 0
        %555 = vmatpush1.bf16.msra.mxu0 0
        %556 = vmatprep.subr.bf16.mxu0 0
        %557 = vmatpush1.bf16.msra.mxu0 0
        %558 = vmatprep.subr.bf16.mxu0 0
        %559 = vmatpush1.bf16.msra.mxu0 0
        %560 = vmatprep.mubr.bf16.mxu0 0
        %561 = vmatmul.mubr.bf16.gmra.mrb[0].mxu0 %v517
        %v562 = vpop.f32.mrb[0].mxu0
        %v563 = vadd.f32 0.0, %v562
        %v564 = vpop.f32.mrb[0].mxu0
        %v565 = vpop.f32.mrb[0].mxu0
        %v566 = vadd.f32 0.0, %v565
        %v567 = vpop.f32.mrb[0].mxu0
        %568 = vmatprep.mubr.bf16.mxu0 0
        %569 = vmatmul.mubr.bf16.gmra.mrb[0].mxu0 %v520
        %v570 = vpop.f32.mrb[0].mxu0
        %v571 = vadd.f32 0.0, %v570
        %v572 = vpop.f32.mrb[0].mxu0
        %v573 = vpop.f32.mrb[0].mxu0
        %v574 = vadd.f32 0.0, %v573
        %v575 = vpop.f32.mrb[0].mxu0
        %576 = vmatprep.mubr.bf16.mxu0 0
        %577 = vmatmul.mubr.bf16.gmra.mrb[0].mxu0 %v523
        %v578 = vpop.f32.mrb[0].mxu0
        %v579 = vadd.f32 0.0, %v578
        %v580 = vpop.f32.mrb[0].mxu0
        %v581 = vpop.f32.mrb[0].mxu0
        %v582 = vadd.f32 0.0, %v581
        %v583 = vpop.f32.mrb[0].mxu0
        %584 = vmatprep.mubr.bf16.mxu0 0
        %585 = vmatmul.mubr.bf16.gmra.mrb[0].mxu0 %v526
        %v586 = vpop.f32.mrb[0].mxu0
        %v587 = vadd.f32 0.0, %v586
        %v588 = vpop.f32.mrb[0].mxu0
        %v589 = vpop.f32.mrb[0].mxu0
        %v590 = vadd.f32 0.0, %v589
        %v591 = vpop.f32.mrb[0].mxu0
        %592 = vdwg.mxu0
        %v593 = vadd.f32 %v448, %v563
        %v594 = vadd.f32 %v451, %v566
        %v595 = vadd.f32 %v456, %v571
        %v596 = vadd.f32 %v459, %v574
        %v597 = vadd.f32 %v464, %v579
        %v598 = vadd.f32 %v467, %v582
        %v599 = vadd.f32 %v472, %v587
        %v600 = vadd.f32 %v475, %v590
        %v601 = vld [vmem:[%s478] sm:$0xf]
        %v602 = vld [vmem:[%s478 + $0x4] sm:$0x1]
        %v603 = vld [vmem:[%s478 + $0x8] sm:$0xf]
        %v604 = vld [vmem:[%s478 + $0xc] sm:$0x1]
        %v605 = vld [vmem:[%s478 + $0x10] sm:$0xf]
        %v606 = vld [vmem:[%s478 + $0x14] sm:$0x1]
        %v607 = vld [vmem:[%s478 + $0x18] sm:$0xf]
        %v608 = vld [vmem:[%s478 + $0x1c] sm:$0x1]
        %v609 = vld [vmem:[%s478 + $0x20] sm:$0xf]
        %v610 = vld [vmem:[%s478 + $0x24] sm:$0x1]
        %v611 = vld [vmem:[%s478 + $0x28] sm:$0xf]
        %v612 = vld [vmem:[%s478 + $0x2c] sm:$0x1]
        %v613 = vld [vmem:[%s478 + $0x30] sm:$0xf]
        %v614 = vld [vmem:[%s478 + $0x34] sm:$0x1]
        %v615 = vld [vmem:[%s478 + $0x38] sm:$0xf]
        %v616 = vld [vmem:[%s478 + $0x3c] sm:$0x1]
        %v618 = vshrl.u32 %v601, 16
        %v620 = vrot.slane %v618, 4
        %v621 = vshll.u32 %v601, 16
        %v623 = vrot.slane %v621, 5
        %v624 = vor.u32 %v620, %v623
        %v625 = vrot.slane %v624, 4
        %v627 = vshll.u32 %v602, 16
        %v629 = vrot.slane %v627, 5
        %v630 = vsel %vm163, %v625, %v629
        %v632 = vshrl.u32 %v603, 16
        %v634 = vrot.slane %v632, 4
        %v635 = vshll.u32 %v603, 16
        %v637 = vrot.slane %v635, 5
        %v638 = vor.u32 %v634, %v637
        %v639 = vrot.slane %v638, 4
        %v641 = vshll.u32 %v604, 16
        %v643 = vrot.slane %v641, 5
        %v644 = vsel %vm163, %v639, %v643
        %v646 = vshrl.u32 %v605, 16
        %v648 = vrot.slane %v646, 4
        %v649 = vshll.u32 %v605, 16
        %v651 = vrot.slane %v649, 5
        %v652 = vor.u32 %v648, %v651
        %v653 = vrot.slane %v652, 4
        %v655 = vshll.u32 %v606, 16
        %v657 = vrot.slane %v655, 5
        %v658 = vsel %vm163, %v653, %v657
        %v660 = vshrl.u32 %v607, 16
        %v662 = vrot.slane %v660, 4
        %v663 = vshll.u32 %v607, 16
        %v665 = vrot.slane %v663, 5
        %v666 = vor.u32 %v662, %v665
        %v667 = vrot.slane %v666, 4
        %v669 = vshll.u32 %v608, 16
        %v671 = vrot.slane %v669, 5
        %v672 = vsel %vm163, %v667, %v671
        %v674 = vshrl.u32 %v609, 16
        %v676 = vrot.slane %v674, 4
        %v677 = vshll.u32 %v609, 16
        %v679 = vrot.slane %v677, 5
        %v680 = vor.u32 %v676, %v679
        %v681 = vrot.slane %v680, 4
        %v683 = vshll.u32 %v610, 16
        %v685 = vrot.slane %v683, 5
        %v686 = vsel %vm163, %v681, %v685
        %v688 = vshrl.u32 %v611, 16
        %v690 = vrot.slane %v688, 4
        %v691 = vshll.u32 %v611, 16
        %v693 = vrot.slane %v691, 5
        %v694 = vor.u32 %v690, %v693
        %v695 = vrot.slane %v694, 4
        %v697 = vshll.u32 %v612, 16
        %v699 = vrot.slane %v697, 5
        %v700 = vsel %vm163, %v695, %v699
        %v702 = vshrl.u32 %v613, 16
        %v704 = vrot.slane %v702, 4
        %v705 = vshll.u32 %v613, 16
        %v707 = vrot.slane %v705, 5
        %v708 = vor.u32 %v704, %v707
        %v709 = vrot.slane %v708, 4
        %v711 = vshll.u32 %v614, 16
        %v713 = vrot.slane %v711, 5
        %v714 = vsel %vm163, %v709, %v713
        %v716 = vshrl.u32 %v615, 16
        %v718 = vrot.slane %v716, 4
        %v719 = vshll.u32 %v615, 16
        %v721 = vrot.slane %v719, 5
        %v722 = vor.u32 %v718, %v721
        %v723 = vrot.slane %v722, 4
        %v725 = vshll.u32 %v616, 16
        %v727 = vrot.slane %v725, 5
        %v728 = vsel %vm163, %v723, %v727
        %s729 = scalar_lea.vmem %s1, 24
        %v730 = vld [vmem:[%s729] sm:$0xf]
        %v731 = vld [vmem:[%s729 + $0x4] sm:$0xf]
        %v732 = vunpack.c.l.b16 %v630
        %v733 = vunpack.c.l.b16 %v644
        %v734 = vunpack.c.l.b16 %v658
        %v735 = vunpack.c.l.b16 %v672
        %v736 = vunpack.c.l.b16 %v686
        %v737 = vunpack.c.l.b16 %v700
        %v738 = vunpack.c.l.b16 %v714
        %v739 = vunpack.c.l.b16 %v728
        %v740 = vpack.c.b16 %v733, %v732
        %v741 = vpack.c.b16 %v735, %v734
        %v742 = vpack.c.b16 %v737, %v736
        %v743 = vpack.c.b16 %v739, %v738
        %v746 = vunpack.c.l.b16 %v730
        %v747 = vunpack.c.l.b16 %v731
        %v748 = vpack.c.b16 %v747, %v746
        %v751 = vsel %vm297, %v740, 0
        %v754 = vsel %vm297, %v741, 0
        %v757 = vsel %vm297, %v742, 0
        %v760 = vsel %vm297, %v743, 0
        %762 = vmatprep.subr.bf16.mxu0 0
        %763 = vmatpush1.bf16.msra.mxu0 %v748
        %764 = vmatprep.subr.bf16.mxu0 0
        %765 = vmatpush1.bf16.msra.mxu0 0
        %766 = vmatprep.subr.bf16.mxu0 0
        %767 = vmatpush1.bf16.msra.mxu0 0
        %768 = vmatprep.subr.bf16.mxu0 0
        %769 = vmatpush1.bf16.msra.mxu0 0
        %770 = vmatprep.subr.bf16.mxu0 0
        %771 = vmatpush1.bf16.msra.mxu0 0
        %772 = vmatprep.subr.bf16.mxu0 0
        %773 = vmatpush1.bf16.msra.mxu0 0
        %774 = vmatprep.subr.bf16.mxu0 0
        %775 = vmatpush1.bf16.msra.mxu0 0
        %776 = vmatprep.subr.bf16.mxu0 0
        %777 = vmatpush1.bf16.msra.mxu0 0
        %778 = vmatprep.subr.bf16.mxu0 0
        %779 = vmatpush1.bf16.msra.mxu0 0
        %780 = vmatprep.subr.bf16.mxu0 0
        %781 = vmatpush1.bf16.msra.mxu0 0
        %782 = vmatprep.subr.bf16.mxu0 0
        %783 = vmatpush1.bf16.msra.mxu0 0
        %784 = vmatprep.subr.bf16.mxu0 0
        %785 = vmatpush1.bf16.msra.mxu0 0
        %786 = vmatprep.subr.bf16.mxu0 0
        %787 = vmatpush1.bf16.msra.mxu0 0
        %788 = vmatprep.subr.bf16.mxu0 0
        %789 = vmatpush1.bf16.msra.mxu0 0
        %790 = vmatprep.subr.bf16.mxu0 0
        %791 = vmatpush1.bf16.msra.mxu0 0
        %792 = vmatprep.subr.bf16.mxu0 0
        %793 = vmatpush1.bf16.msra.mxu0 0
        %794 = vmatprep.mubr.bf16.mxu0 0
        %795 = vmatmul.mubr.bf16.gmra.mrb[0].mxu0 %v751
        %v796 = vpop.f32.mrb[0].mxu0
        %v797 = vadd.f32 0.0, %v796
        %v798 = vpop.f32.mrb[0].mxu0
        %v799 = vpop.f32.mrb[0].mxu0
        %v800 = vadd.f32 0.0, %v799
        %v801 = vpop.f32.mrb[0].mxu0
        %802 = vmatprep.mubr.bf16.mxu0 0
        %803 = vmatmul.mubr.bf16.gmra.mrb[0].mxu0 %v754
        %v804 = vpop.f32.mrb[0].mxu0
        %v805 = vadd.f32 0.0, %v804
        %v806 = vpop.f32.mrb[0].mxu0
        %v807 = vpop.f32.mrb[0].mxu0
        %v808 = vadd.f32 0.0, %v807
        %v809 = vpop.f32.mrb[0].mxu0
        %810 = vmatprep.mubr.bf16.mxu0 0
        %811 = vmatmul.mubr.bf16.gmra.mrb[0].mxu0 %v757
        %v812 = vpop.f32.mrb[0].mxu0
        %v813 = vadd.f32 0.0, %v812
        %v814 = vpop.f32.mrb[0].mxu0
        %v815 = vpop.f32.mrb[0].mxu0
        %v816 = vadd.f32 0.0, %v815
        %v817 = vpop.f32.mrb[0].mxu0
        %818 = vmatprep.mubr.bf16.mxu0 0
        %819 = vmatmul.mubr.bf16.gmra.mrb[0].mxu0 %v760
        %v820 = vpop.f32.mrb[0].mxu0
        %v821 = vadd.f32 0.0, %v820
        %v822 = vpop.f32.mrb[0].mxu0
        %v823 = vpop.f32.mrb[0].mxu0
        %v824 = vadd.f32 0.0, %v823
        %v825 = vpop.f32.mrb[0].mxu0
        %826 = vdwg.mxu0
        %v827 = vadd.f32 %v593, %v797
        %v828 = vadd.f32 %v594, %v800
        %v829 = vadd.f32 %v595, %v805
        %v830 = vadd.f32 %v596, %v808
        %v831 = vadd.f32 %v597, %v813
        %v832 = vadd.f32 %v598, %v816
        %v833 = vadd.f32 %v599, %v821
        %v834 = vadd.f32 %v600, %v824
        %vm835 = vcmask 64512
        %v836 = vsel %vm835, %v827, 0.0
        %v837 = vsel %vm835, %v828, 0.0
        %v838 = vadd.f32 %v836, %v837
        %v839 = vsel %vm835, %v829, 0.0
        %v840 = vadd.f32 %v838, %v839
        %v841 = vsel %vm835, %v830, 0.0
        %v842 = vadd.f32 %v840, %v841
        %v843 = vsel %vm835, %v831, 0.0
        %v844 = vadd.f32 %v842, %v843
        %v845 = vsel %vm835, %v832, 0.0
        %v846 = vadd.f32 %v844, %v845
        %v847 = vsel %vm835, %v833, 0.0
        %v848 = vadd.f32 %v846, %v847
        %v849 = vsel %vm835, %v834, 0.0
        %v850 = vadd.f32 %v848, %v849
        %v851 = vrot.slane %v850, 4
        %v852 = vadd.f32 %v850, %v851
        %v853 = vrot.slane %v852, 2
        %v854 = vadd.f32 %v852, %v853
        %v855 = vrot.slane %v854, 1
        %v856 = vadd.f32 %v854, %v855
        %v857 = vrcp.pop 64.0
        %v858 = vmul.f32 %v856, %v857
        %v859 = vsub.f32 %v827, %v858
        %v860 = vsub.f32 %v828, %v858
        %v861 = vsub.f32 %v829, %v858
        %v862 = vsub.f32 %v830, %v858
        %v863 = vsub.f32 %v831, %v858
        %v864 = vsub.f32 %v832, %v858
        %v865 = vsub.f32 %v833, %v858
        %v866 = vsub.f32 %v834, %v858
        %v867 = vmul.f32 %v859, %v859
        %v868 = vmul.f32 %v860, %v860
        %v869 = vmul.f32 %v861, %v861
        %v870 = vmul.f32 %v862, %v862
        %v871 = vmul.f32 %v863, %v863
        %v872 = vmul.f32 %v864, %v864
        %v873 = vmul.f32 %v865, %v865
        %v874 = vmul.f32 %v866, %v866
        %v875 = vsel %vm835, %v867, 0.0
        %v876 = vsel %vm835, %v868, 0.0
        %v877 = vadd.f32 %v875, %v876
        %v878 = vsel %vm835, %v869, 0.0
        %v879 = vadd.f32 %v877, %v878
        %v880 = vsel %vm835, %v870, 0.0
        %v881 = vadd.f32 %v879, %v880
        %v882 = vsel %vm835, %v871, 0.0
        %v883 = vadd.f32 %v881, %v882
        %v884 = vsel %vm835, %v872, 0.0
        %v885 = vadd.f32 %v883, %v884
        %v886 = vsel %vm835, %v873, 0.0
        %v887 = vadd.f32 %v885, %v886
        %v888 = vsel %vm835, %v874, 0.0
        %v889 = vadd.f32 %v887, %v888
        %v890 = vrot.slane %v889, 4
        %v891 = vadd.f32 %v889, %v890
        %v892 = vrot.slane %v891, 2
        %v893 = vadd.f32 %v891, %v892
        %v894 = vrot.slane %v893, 1
        %v895 = vadd.f32 %v893, %v894
        %v896 = vmul.f32 %v895, %v857
        %v897 = vadd.f32 %v896, 1e-05
        %v898 = vrsqrt.pop %v897
        %v899 = vmul.f32 %v859, %v898
        %v900 = vmul.f32 %v860, %v898
        %v901 = vmul.f32 %v861, %v898
        %v902 = vmul.f32 %v862, %v898
        %v903 = vmul.f32 %v863, %v898
        %v904 = vmul.f32 %v864, %v898
        %v905 = vmul.f32 %v865, %v898
        %v906 = vmul.f32 %v866, %v898
        %vm907 = vcmp.gt.f32.partialorder %v899, 0.0
        %vm908 = vcmp.gt.f32.partialorder %v900, 0.0
        %vm909 = vcmp.gt.f32.partialorder %v901, 0.0
        %vm910 = vcmp.gt.f32.partialorder %v902, 0.0
        %vm911 = vcmp.gt.f32.partialorder %v903, 0.0
        %vm912 = vcmp.gt.f32.partialorder %v904, 0.0
        %vm913 = vcmp.gt.f32.partialorder %v905, 0.0
        %vm914 = vcmp.gt.f32.partialorder %v906, 0.0
        %v915 = vmul.f32 %v899, 0.2
        %v916 = vmul.f32 %v900, 0.2
        %v917 = vmul.f32 %v901, 0.2
        %v918 = vmul.f32 %v902, 0.2
        %v919 = vmul.f32 %v903, 0.2
        %v920 = vmul.f32 %v904, 0.2
        %v921 = vmul.f32 %v905, 0.2
        %v922 = vmul.f32 %v906, 0.2
        %v923 = vsel %vm907, %v899, %v915
        %v924 = vsel %vm908, %v900, %v916
        %v925 = vsel %vm909, %v901, %v917
        %v926 = vsel %vm910, %v902, %v918
        %v927 = vsel %vm911, %v903, %v919
        %v928 = vsel %vm912, %v904, %v920
        %v929 = vsel %vm913, %v905, %v921
        %v930 = vsel %vm914, %v906, %v922
        %931 = vxpose.xlu0.b32.start [1/16] %v923, 128
        %932 = vxpose.xlu0.b32.cont [2/16] %v924, 128
        %933 = vxpose.xlu0.b32.cont [3/16] %v925, 128
        %934 = vxpose.xlu0.b32.cont [4/16] %v926, 128
        %935 = vxpose.xlu0.b32.cont [5/16] %v927, 128
        %936 = vxpose.xlu0.b32.cont [6/16] %v928, 128
        %937 = vxpose.xlu0.b32.cont [7/16] %v929, 128
        %938 = vxpose.xlu0.b32.cont [8/16] %v930, 128
        %939 = vxpose.xlu0.b32.cont [9/16] 0.0, 128
        %940 = vxpose.xlu0.b32.cont [10/16] 0.0, 128
        %941 = vxpose.xlu0.b32.cont [11/16] 0.0, 128
        %942 = vxpose.xlu0.b32.cont [12/16] 0.0, 128
        %943 = vxpose.xlu0.b32.cont [13/16] 0.0, 128
        %944 = vxpose.xlu0.b32.cont [14/16] 0.0, 128
        %945 = vxpose.xlu0.b32.cont [15/16] 0.0, 128
        %946 = vxpose.xlu0.b32.end [16/16] 0.0, 128
        %v947 = vpop.trf.xlu0
        %v948 = vpop.trf.xlu0
        %v949 = vpop.trf.xlu0
        %v950 = vpop.trf.xlu0
        %v951 = vpop.trf.xlu0
        %v952 = vpop.trf.xlu0
        %v953 = vpop.trf.xlu0
        %v954 = vpop.trf.xlu0
        %v955 = vpop.trf.xlu0
        %v956 = vpop.trf.xlu0
        %v957 = vpop.trf.xlu0
        %v958 = vpop.trf.xlu0
        %v959 = vpop.trf.xlu0
        %v960 = vpop.trf.xlu0
        %v961 = vpop.trf.xlu0
        %v962 = vpop.trf.xlu0
        %vm963 = vcmask 523264
        %964 = vst.msk [vmem:[%s136] sm:$0xff] %vm963, %v947
        %s965 = sand.u32 %s71, 1
        %s966 = scalar_lea.sflag [#allocation3], %s965
        %s967 = sand.u32 %s71, 1
        %s968 = smul.addr %s967, 8
        %s969 = scalar_lea.vmem [#allocation2], %s968
        // Predicated region
        $region29: #{tpu_custom_call.1} parent=27 // pred_check
          %p970 = pneg %p81
        $region30: #{tpu_custom_call.1} parent=27 // pred_check_branch
          %972 = sbr.rel (%p970) target = $region32
        $region31: #{tpu_custom_call.1} parent=27 // pred_region
          %s974 = ssub.s32 128, 128
          %975 = vsyncadd %s966, %s974
          %s976 = smul.addr %s16, 128
          %s977 = scalar_lea.hbm %s2, %s976
          %s979 = sshll.u32 %s969, 4
          %s980 = int_to_ptr.vmem [resolvable:$true] %s979
          %982 = dma.vmem_to_hbm [thread:$0]  %s980, 128, %s977, %s966
        $region32: #{tpu_custom_call.1} parent=27 // pred_fallthru
          _
      $region28: #{tpu_custom_call.1} parent=5 // pred_fallthru
        _
      %p983 = scmp.le.s32.totalorder 2, %s11
      // Predicated region
      $region33: #{tpu_custom_call.1} parent=5 // pred_check
        %p984 = pneg %p983
      $region34: #{tpu_custom_call.1} parent=5 // pred_check_branch
        %986 = sbr.rel (%p984) target = $region36
      $region35: #{tpu_custom_call.1} parent=5 // pred_region
        %s987 = ssub.s32 %s11, 2
        // Predicated region
        $region37: #{tpu_custom_call.1} parent=35 // pred_check
          %p988 = pneg %p87
        $region38: #{tpu_custom_call.1} parent=35 // pred_check_branch
          %990 = sbr.rel (%p988) target = $region40
        $region39: #{tpu_custom_call.1} parent=35 // pred_region
          %s991 = sand.u32 %s72, 1
          %s992 = scalar_lea.sflag [#allocation3], %s991
          %s993 = sand.u32 %s72, 1
          %s994 = smul.addr %s993, 8
          %s995 = scalar_lea.vmem [#allocation2], %s994
          %996 = dma.done %s992, 128
        $region40: #{tpu_custom_call.1} parent=35 // pred_fallthru
          _
      $region36: #{tpu_custom_call.1} parent=5 // pred_fallthru
        _
    $region6: #{tpu_custom_call.1} parent=1 // loop_footer
      %s15 = sadd.s32 1, %s11
    $region7: #{tpu_custom_call.1} parent=1 // loop_footer_branch
      %10 = sbr.rel target = $region3
    $region8: #{tpu_custom_call.1} parent=1 // loop_exit
      _
    %997 = vsyncpa [#allocation3], 1
    %s998 = scalar_lea.sflag [#allocation3], 1
    %999 = vsyncpa %s998, 1

</llo_original>
